<compile_context>
chip_gen: v7x
topology: tpu7x:2x2x1
jax: 0.10.0
libtpu: 0.0.40
codegen_flags: <defaults>
</compile_context>

<pallas_src>
import jax
import jax.numpy as jnp
from jax.experimental import pallas as pl
from jax.experimental.pallas import tpu as pltpu


def _attention_pooling_kernel(hs_ref, mask_ref, w_ref, b_ref, o_ref):
    hs = hs_ref[...]                                   # (tb, S, H), native dtype
    tb, _, hidden = hs.shape

    # scores[b, 0, s] = sum_h w[h] * hs[b, s, h]  == Linear(H, 1)  (MXU, f32 acc)
    w_b = jnp.broadcast_to(
        w_ref[...].astype(hs.dtype).reshape(1, 1, hidden), (tb, 1, hidden))
    scores = jnp.einsum("bqh,bsh->bqs", w_b, hs,
                        preferred_element_type=jnp.float32)     # (tb, 1, S) f32
    scores = scores + b_ref[0, 0]                               # scalar bias (SMEM)

    # masked_fill(mask == 0, -1e9)
    scores = jnp.where(mask_ref[...] == 0, jnp.float32(-1e9), scores)

    # softmax over the sequence axis (last axis here -> XLU lane reduce)
    m = jnp.max(scores, axis=-1, keepdims=True)
    e = jnp.exp(scores - m)
    denom = jnp.sum(e, axis=-1, keepdims=True)
    probs = e * pl.reciprocal(denom, approx=True)               # EUP reciprocal

    # pooled[b, 0, h] = sum_s probs[b, 0, s] * hs[b, s, h]      (MXU, f32 acc)
    pooled = jnp.einsum("bqs,bsh->bqh", probs.astype(hs.dtype), hs,
                        preferred_element_type=jnp.float32)     # (tb, 1, H) f32
    o_ref[...] = pooled.astype(o_ref.dtype)


def _vmem_limit_bytes():
    """Generation-aware scoped-VMEM request.

    v5e/v6e have 128 MiB physical VMEM per TensorCore, v7x only 64 MiB.
    Request ~half of physical (capped at 64 MiB, floored at the 16 MiB
    default) so double-buffered blocks plus compiler temporaries always fit.
    """
    cap = 64 * 1024 * 1024  # conservative fallback = v7x per-TC physical VMEM
    try:
        cap = int(pltpu.get_tpu_info().vmem_capacity_bytes)
    except Exception:
        pass
    return max(16 * 1024 * 1024, min(cap // 2, 64 * 1024 * 1024))


def _pick_tile_b(batch, seq, hidden, itemsize, block_budget_bytes):
    """Batch rows per grid step.

    The hidden-states block is the dominant VMEM consumer and is
    double-buffered by the pipeline; block_budget_bytes is already ~1/4 of
    the scoped limit so 2x block + small intermediates fit with headroom.
    Also cap so the grid has >= 2 steps, letting the "parallel" batch axis
    shard across v7x's two TensorCores (harmless on single-core v5e/v6e:
    per-step overhead is ~0.35 us).
    """
    bytes_per_row = max(seq * hidden * itemsize, 1)
    rows = max(1, min(int(block_budget_bytes // bytes_per_row), 1024))
    if batch > 1:
        rows = min(rows, -(-batch // 2))   # ceil(batch / 2)
    return max(1, min(rows, batch))


def attention_pooling(hidden_states, attention_mask, w, b):
    """hidden_states: (B, S, H); attention_mask: (B, S); w: (1, H); b: (1, 1)."""
    batch, seq, hidden = hidden_states.shape
    vmem_limit = _vmem_limit_bytes()
    tile_b = _pick_tile_b(batch, seq, hidden, hidden_states.dtype.itemsize,
                          block_budget_bytes=vmem_limit // 4)
    grid = (pl.cdiv(batch, tile_b),)

    # Mask presented as (B, 1, S) so it shares the (tb, 1, S) score layout.
    mask3 = attention_mask.reshape(batch, 1, seq).astype(jnp.int32)

    pooled3 = pl.pallas_call(
        _attention_pooling_kernel,
        out_shape=jax.ShapeDtypeStruct((batch, 1, hidden), hidden_states.dtype),
        grid=grid,
        in_specs=[
            pl.BlockSpec((tile_b, seq, hidden), lambda i: (i, 0, 0)),  # hidden states
            pl.BlockSpec((tile_b, 1, seq), lambda i: (i, 0, 0)),       # attention mask
            pl.BlockSpec((1, hidden), lambda i: (0, 0)),               # attn weight (VMEM resident)
            pl.BlockSpec(memory_space=pltpu.MemorySpace.SMEM),         # attn bias (scalar)
        ],
        out_specs=pl.BlockSpec((tile_b, 1, hidden), lambda i: (i, 0, 0)),
        compiler_params=pltpu.CompilerParams(
            dimension_semantics=("parallel",),
            vmem_limit_bytes=vmem_limit),
    )(hidden_states, mask3, w, b)
    return pooled3.reshape(batch, hidden)


def _reference(hidden_states, attention_mask, w, b):
    """Pure-JAX mirror of the PyTorch forward (eval mode)."""
    scores = jnp.einsum("bsh,h->bs", hidden_states, w[0]) + b[0, 0]
    scores = jnp.where(attention_mask == 0, -1e9, scores)
    probs = jax.nn.softmax(scores, axis=1)
    return jnp.sum(hidden_states * probs[..., None], axis=1)


if __name__ == "__main__":
    B, S, H = 2, 8, 32

    key = jax.random.PRNGKey(0)
    k_hs, k_w, k_b, k_mask = jax.random.split(key, 4)

    hidden_states = jax.random.normal(k_hs, (B, S, H), jnp.float32)
    # nn.Linear(H, 1) parameters, stored as a (1, H) row vector + (1, 1) bias
    w = jax.random.normal(k_w, (1, H), jnp.float32) * (1.0 / jnp.sqrt(H))
    b = jax.random.normal(k_b, (1, 1), jnp.float32) * 0.01
    # attention mask with some padding zeros (int, as torch would pass)
    attention_mask = (jax.random.uniform(k_mask, (B, S)) > 0.25).astype(jnp.int32)
    attention_mask = attention_mask.at[:, 0].set(1)  # keep every row non-empty

    pooled = attention_pooling(hidden_states, attention_mask, w, b)
    pooled = jax.block_until_ready(pooled)

    ref = _reference(hidden_states, attention_mask, w, b)
    assert pooled.shape == (B, H)
    # Tolerance accounts for the approximate (EUP) reciprocal in the softmax.
    assert jnp.allclose(pooled, ref, atol=5e-3, rtol=5e-3), float(
        jnp.max(jnp.abs(pooled - ref)))

    print("KERNEL_OK")
</pallas_src>

<mosaic_0001>
module attributes {stable_mosaic.version = 11 : i64} {
  func.func @_attention_pooling_kernel(%arg0: i32, %arg1: memref<1x8x32xf32, #tpu.memory_space<vmem>>, %arg2: memref<1x1x8xi32, #tpu.memory_space<vmem>>, %arg3: memref<1x32xf32, #tpu.memory_space<vmem>>, %arg4: memref<1x1xf32, #tpu.memory_space<smem>>, %arg5: memref<1x1x32xf32, #tpu.memory_space<vmem>>) attributes {dimension_semantics = [#tpu.dimension_semantics<parallel>], iteration_bounds = array<i64: 2>, scalar_prefetch = 0 : i64, scratch_operands = 0 : i64, tpu.core_type = #tpu.core_type<tc>, window_params = [{transform_indices = @transform_0, window_bounds = array<i64: 1, 8, 32>}, {transform_indices = @transform_1, window_bounds = array<i64: 1, 1, 8>}, {pipeline_mode = #tpu.pipeline_mode<synchronous>, transform_indices = @transform_2, window_bounds = array<i64: 1, 32>}, {transform_indices = @transform_3, window_bounds = array<i64: 1, 1>}, {transform_indices = @transform_4, window_bounds = array<i64: 1, 1, 32>}]} {
    %c0 = arith.constant 0 : index
    %c0_0 = arith.constant 0 : index
    %c0_1 = arith.constant 0 : index
    %0 = vector.load %arg1[%c0, %c0_0, %c0_1] : memref<1x8x32xf32, #tpu.memory_space<vmem>>, vector<1x8x32xf32>
    %c0_2 = arith.constant 0 : index
    %c0_3 = arith.constant 0 : index
    %1 = vector.load %arg3[%c0_2, %c0_3] : memref<1x32xf32, #tpu.memory_space<vmem>>, vector<1x32xf32>
    %2 = vector.shape_cast %1 : vector<1x32xf32> to vector<1x1x32xf32>
    "tpu.trace_start"() <{level = 10 : i32, message = "bqh,bsh->bqs"}> : () -> ()
    %cst = arith.constant dense<0.000000e+00> : vector<1x1x8xf32>
    %3 = tpu.matmul %2, %0, %cst {dimension_numbers = #tpu.dot_dimension_numbers<[2], [2], [1], [1], [0, 0, 0, 1, 1, 1], [0], [0]>} : vector<1x1x32xf32>, vector<1x8x32xf32>, vector<1x1x8xf32> -> vector<1x1x8xf32>
    "tpu.trace_stop"() : () -> ()
    %c0_4 = arith.constant 0 : index
    %c0_5 = arith.constant 0 : index
    %4 = memref.load %arg4[%c0_4, %c0_5] : memref<1x1xf32, #tpu.memory_space<smem>>
    %5 = vector.broadcast %4 : f32 to vector<1x1x8xf32>
    %6 = arith.addf %3, %5 : vector<1x1x8xf32>
    %c0_6 = arith.constant 0 : index
    %c0_7 = arith.constant 0 : index
    %c0_8 = arith.constant 0 : index
    %7 = vector.load %arg2[%c0_6, %c0_7, %c0_8] : memref<1x1x8xi32, #tpu.memory_space<vmem>>, vector<1x1x8xi32>
    %c0_i32 = arith.constant 0 : i32
    %8 = vector.broadcast %c0_i32 : i32 to vector<1x1x8xi32>
    %9 = arith.cmpi eq, %7, %8 : vector<1x1x8xi32>
    %cst_9 = arith.constant -1.000000e+09 : f32
    %10 = vector.broadcast %cst_9 : f32 to vector<1x1x8xf32>
    %11 = arith.select %9, %10, %6 : vector<1x1x8xi1>, vector<1x1x8xf32>
    %cst_10 = arith.constant dense<0xFF800000> : vector<1x1xf32>
    %12 = vector.multi_reduction <maximumf>, %11, %cst_10 [2] : vector<1x1x8xf32> to vector<1x1xf32>
    %13 = vector.shape_cast %12 : vector<1x1xf32> to vector<1x1x1xf32>
    %14 = vector.broadcast %13 : vector<1x1x1xf32> to vector<1x1x8xf32>
    %15 = arith.subf %11, %14 : vector<1x1x8xf32>
    %16 = math.exp %15 : vector<1x1x8xf32>
    %cst_11 = arith.constant dense<0.000000e+00> : vector<1x1xf32>
    %17 = vector.multi_reduction <add>, %16, %cst_11 [2] : vector<1x1x8xf32> to vector<1x1xf32>
    %18 = vector.shape_cast %17 : vector<1x1xf32> to vector<1x1x1xf32>
    %19 = tpu.reciprocal %18 {approx = true} : vector<1x1x1xf32> -> vector<1x1x1xf32>
    %20 = vector.broadcast %19 : vector<1x1x1xf32> to vector<1x1x8xf32>
    %21 = arith.mulf %16, %20 : vector<1x1x8xf32>
    "tpu.trace_start"() <{level = 10 : i32, message = "bqs,bsh->bqh"}> : () -> ()
    %cst_12 = arith.constant dense<0.000000e+00> : vector<1x1x32xf32>
    %22 = tpu.matmul %21, %0, %cst_12 {dimension_numbers = #tpu.dot_dimension_numbers<[2], [1], [1], [2], [0, 0, 0, 1, 1, 2], [0], [0]>} : vector<1x1x8xf32>, vector<1x8x32xf32>, vector<1x1x32xf32> -> vector<1x1x32xf32>
    "tpu.trace_stop"() : () -> ()
    %c0_13 = arith.constant 0 : index
    %c0_14 = arith.constant 0 : index
    %c0_15 = arith.constant 0 : index
    %23 = vector.load %arg5[%c0_13, %c0_14, %c0_15] : memref<1x1x32xf32, #tpu.memory_space<vmem>>, vector<1x1x32xf32>
    tpu.vector_store %arg5[%c0_13, %c0_14, %c0_15], %22 {strides = array<i32>} : memref<1x1x32xf32, #tpu.memory_space<vmem>>, vector<1x1x32xf32>,
    return
  }
  func.func @transform_0(%arg0: i32) -> (i32, i32, i32) {
    %c0_i32 = arith.constant 0 : i32
    %c0_i32_0 = arith.constant 0 : i32
    %c0_i32_1 = arith.constant 0 : i32
    return %arg0, %c0_i32, %c0_i32_0 : i32, i32, i32
  }
  func.func @transform_1(%arg0: i32) -> (i32, i32, i32) {
    %c0_i32 = arith.constant 0 : i32
    %c0_i32_0 = arith.constant 0 : i32
    %c0_i32_1 = arith.constant 0 : i32
    return %arg0, %c0_i32, %c0_i32_0 : i32, i32, i32
  }
  func.func @transform_2(%arg0: i32) -> (i32, i32) {
    %c0_i32 = arith.constant 0 : i32
    %c0_i32_0 = arith.constant 0 : i32
    %c0_i32_1 = arith.constant 0 : i32
    return %c0_i32, %c0_i32_0 : i32, i32
  }
  func.func @transform_3(%arg0: i32) -> (i32, i32) {
    %c0_i32 = arith.constant 0 : i32
    %c0_i32_0 = arith.constant 0 : i32
    %c0_i32_1 = arith.constant 0 : i32
    return %c0_i32, %c0_i32_0 : i32, i32
  }
  func.func @transform_4(%arg0: i32) -> (i32, i32, i32) {
    %c0_i32 = arith.constant 0 : i32
    %c0_i32_0 = arith.constant 0 : i32
    %c0_i32_1 = arith.constant 0 : i32
    return %arg0, %c0_i32, %c0_i32_0 : i32, i32, i32
  }
}

</mosaic_0001>

<llo_original>
// kernel: tpu_custom_call.1
$region0: #{tpu_custom_call.1}
  #allocation0 [shape = 'u32[]', space=smem, size = 0x4, offset = 0x4, fixed_abs, tag = 'smem constant byte address 0x4 - core index']
  #allocation1 [shape = 'u32[144,128]{1,0:T(1,128)}', space=vmem, size = 0x12000, scoped, tag = 'internal scratch']
  #allocation2 [shape = 'f32[1,1]{1,0:T(1,128)S(6)}', space=smem, size = 0x200, scoped, tag = 'scoped memory for tpu_custom_call.1']
  %s0 = inlined_call_operand.hbm [shape: f32[2,8,32], index: 0, kind: input, shape index: {}]
  %s1 = inlined_call_operand.vmem [shape: s32[2,1,8], index: 1, kind: input, shape index: {}]
  %s2 = inlined_call_operand.vmem [shape: f32[1,32], index: 2, kind: input, shape index: {}]
  %s3 = inlined_call_operand.<no memory space> [shape: f32[1,1], index: 3, kind: input, shape index: {}]
  %s4 = inlined_call_operand.hbm [shape: f32[2,1,32], index: 4, kind: output, shape index: {}]
  %s5 = sld [smem:[#allocation0]]
  $region53: #{tpu_custom_call.1} parent=0
    _
  %s7 = ssub.s32 1, %s5
  %s8 = scalar_select 0, %s7, %s5
  %9 = sst [smem:[#allocation2]] %s3
  $region1: #{tpu_custom_call.1} parent=0
    #allocation3 [shape = 'u8[8192]{0}', space=vmem, size = 0x2000, scoped, tag = 'input window, operand 0']
    #allocation4 [shape = 's32[2]{0}', space=sflag, size = 0x8, scoped, tag = 'scoped memory for tpu_custom_call.1']
    #allocation5 [shape = 's32[2]{0}', space=sflag, size = 0x8, scoped, tag = 'scoped memory for tpu_custom_call.1']
    #allocation6 [shape = 'u8[1024]{0}', space=vmem, size = 0x400, scoped, tag = 'output window, operand 0']
    %10 = vsyncpa [#allocation4], 0
    %s11 = scalar_lea.sflag [#allocation4], 1
    %12 = vsyncpa %s11, 0
    %13 = vsyncpa [#allocation5], 0
    %s14 = scalar_lea.sflag [#allocation5], 1
    %15 = vsyncpa %s14, 0
    loop: start=0, step=1, limit=4
    $region2: #{tpu_custom_call.1} parent=1 // loop_pre_header
      _
    $region3: #{tpu_custom_call.1} parent=1 // loop_header
      %s17 = sphi 0, %s21
      %p18 = scmp.ge.s32.totalorder %s17, 4
      %s27 = sphi 0, %s29
      %s30 = sphi 0, %s27
      %s31 = sphi 0, %s30
      %s47 = sphi 0, %s31
      %s53 = sphi 0, %s55
      %s56 = sphi 0, %s53
      %s57 = sphi 0, %s56
      %s73 = sphi 0, %s57
      %s77 = sphi 0, %s77
      %s79 = sphi 0, %s77
      %s80 = sphi 0, %s79
      %s94 = sphi 0, %s80
      %s98 = sphi 0, %s98
      %s100 = sphi 0, %s98
      %s101 = sphi 0, %s100
      %s115 = sphi 0, %s101
      %s121 = sphi 0, %s123
      %s124 = sphi 0, %s121
      %s125 = sphi 0, %s124
      %s141 = sphi 0, %s125
    $region4: #{tpu_custom_call.1} parent=1 // loop_header_branch
      %20 = sbr.rel (%p18) target = $region8
    $region5: #{tpu_custom_call.1} parent=1 // loop_body
      %s22 = ssub.s32 %s17, 1
      %s23 = ssub.s32 %s17, 2
      %s24 = sadd.s32 %s17, 1
      %s25 = ssub.s32 %s17, %s24
      %p26 = scmp.eq.s32.totalorder %s25, 0
      %s28 = sadd.s32 %s27, 1
      %s29 = scalar_select %p26, %s27, %s28
      %p32 = pneg %p26
      %p33 = scmp.eq.s32.totalorder %s17, 1
      %p34 = por %p32, %p33
      %p35 = scmp.ne.s32.totalorder %s27, %s30
      %p36 = scmp.eq.s32.totalorder %s17, 0
      %p37 = por %p35, %p36
      %p38 = scmp.ne.s32.totalorder %s27, %s30
      %p39 = scmp.eq.s32.totalorder %s22, 1
      %p40 = por %p38, %p39
      %p41 = scmp.ne.s32.totalorder %s30, %s31
      %p42 = scmp.eq.s32.totalorder %s22, 0
      %p43 = por %p41, %p42
      %p44 = scmp.ne.s32.totalorder %s30, %s31
      %p45 = scmp.eq.s32.totalorder %s23, 1
      %p46 = por %p44, %p45
      %p48 = scmp.ne.s32.totalorder %s31, %s47
      %p49 = scmp.eq.s32.totalorder %s23, 0
      %p50 = por %p48, %p49
      %s51 = ssub.s32 %s17, %s24
      %p52 = scmp.eq.s32.totalorder %s51, 0
      %s54 = sadd.s32 %s53, 1
      %s55 = scalar_select %p52, %s53, %s54
      %p58 = pneg %p52
      %p59 = scmp.eq.s32.totalorder %s17, 1
      %p60 = por %p58, %p59
      %p61 = scmp.ne.s32.totalorder %s53, %s56
      %p62 = scmp.eq.s32.totalorder %s17, 0
      %p63 = por %p61, %p62
      %p64 = scmp.ne.s32.totalorder %s53, %s56
      %p65 = scmp.eq.s32.totalorder %s22, 1
      %p66 = por %p64, %p65
      %p67 = scmp.ne.s32.totalorder %s56, %s57
      %p68 = scmp.eq.s32.totalorder %s22, 0
      %p69 = por %p67, %p68
      %p70 = scmp.ne.s32.totalorder %s56, %s57
      %p71 = scmp.eq.s32.totalorder %s23, 1
      %p72 = por %p70, %p71
      %p74 = scmp.ne.s32.totalorder %s57, %s73
      %p75 = scmp.eq.s32.totalorder %s23, 0
      %p76 = por %p74, %p75
      %s78 = sadd.s32 %s77, 1
      %p81 = scmp.eq.s32.totalorder %s17, 1
      %p82 = scmp.ne.s32.totalorder %s77, %s79
      %p83 = scmp.eq.s32.totalorder %s17, 0
      %p84 = por %p82, %p83
      %p85 = scmp.ne.s32.totalorder %s77, %s79
      %p86 = scmp.eq.s32.totalorder %s22, 1
      %p87 = por %p85, %p86
      %p88 = scmp.ne.s32.totalorder %s79, %s80
      %p89 = scmp.eq.s32.totalorder %s22, 0
      %p90 = por %p88, %p89
      %p91 = scmp.ne.s32.totalorder %s79, %s80
      %p92 = scmp.eq.s32.totalorder %s23, 1
      %p93 = por %p91, %p92
      %p95 = scmp.ne.s32.totalorder %s80, %s94
      %p96 = scmp.eq.s32.totalorder %s23, 0
      %p97 = por %p95, %p96
      %s99 = sadd.s32 %s98, 1
      %p102 = scmp.eq.s32.totalorder %s17, 1
      %p103 = scmp.ne.s32.totalorder %s98, %s100
      %p104 = scmp.eq.s32.totalorder %s17, 0
      %p105 = por %p103, %p104
      %p106 = scmp.ne.s32.totalorder %s98, %s100
      %p107 = scmp.eq.s32.totalorder %s22, 1
      %p108 = por %p106, %p107
      %p109 = scmp.ne.s32.totalorder %s100, %s101
      %p110 = scmp.eq.s32.totalorder %s22, 0
      %p111 = por %p109, %p110
      %p112 = scmp.ne.s32.totalorder %s100, %s101
      %p113 = scmp.eq.s32.totalorder %s23, 1
      %p114 = por %p112, %p113
      %p116 = scmp.ne.s32.totalorder %s101, %s115
      %p117 = scmp.eq.s32.totalorder %s23, 0
      %p118 = por %p116, %p117
      %s119 = ssub.s32 %s17, %s24
      %p120 = scmp.eq.s32.totalorder %s119, 0
      %s122 = sadd.s32 %s121, 1
      %s123 = scalar_select %p120, %s121, %s122
      %p126 = pneg %p120
      %p127 = scmp.eq.s32.totalorder %s17, 1
      %p128 = por %p126, %p127
      %p129 = scmp.ne.s32.totalorder %s121, %s124
      %p130 = scmp.eq.s32.totalorder %s17, 0
      %p131 = por %p129, %p130
      %p132 = scmp.ne.s32.totalorder %s121, %s124
      %p133 = scmp.eq.s32.totalorder %s22, 1
      %p134 = por %p132, %p133
      %p135 = scmp.ne.s32.totalorder %s124, %s125
      %p136 = scmp.eq.s32.totalorder %s22, 0
      %p137 = por %p135, %p136
      %p138 = scmp.ne.s32.totalorder %s124, %s125
      %p139 = scmp.eq.s32.totalorder %s23, 1
      %p140 = por %p138, %p139
      %p142 = scmp.ne.s32.totalorder %s125, %s141
      %p143 = scmp.eq.s32.totalorder %s23, 0
      %p144 = por %p142, %p143
      %p145 = scmp.le.s32.totalorder 1, %s17
      %p146 = scmp.lt.s32.totalorder %s17, 3
      %p147 = pnand %p145, %p146
      %p148 = pneg %p147
      // Predicated region
      $region9: #{tpu_custom_call.1} parent=5 // pred_check
        _
      $region10: #{tpu_custom_call.1} parent=5 // pred_check_branch
        %150 = sbr.rel (%p147) target = $region12
      $region11: #{tpu_custom_call.1} parent=5 // pred_region
        %s151 = ssub.s32 %s17, 1
        // Predicated region
        $region13: #{tpu_custom_call.1} parent=11 // pred_check
          %p152 = pneg %p90
        $region14: #{tpu_custom_call.1} parent=11 // pred_check_branch
          %154 = sbr.rel (%p152) target = $region16
        $region15: #{tpu_custom_call.1} parent=11 // pred_region
          _
        $region16: #{tpu_custom_call.1} parent=11 // pred_fallthru
          _
        // Predicated region
        $region17: #{tpu_custom_call.1} parent=11 // pred_check
          %p155 = pneg %p111
        $region18: #{tpu_custom_call.1} parent=11 // pred_check_branch
          %157 = sbr.rel (%p155) target = $region20
        $region19: #{tpu_custom_call.1} parent=11 // pred_region
          _
        $region20: #{tpu_custom_call.1} parent=11 // pred_fallthru
          _
      $region12: #{tpu_custom_call.1} parent=5 // pred_fallthru
        _
      %p158 = scmp.lt.s32.totalorder %s17, 2
      // Predicated region
      $region21: #{tpu_custom_call.1} parent=5 // pred_check
        %p159 = pneg %p158
      $region22: #{tpu_custom_call.1} parent=5 // pred_check_branch
        %161 = sbr.rel (%p159) target = $region24
      $region23: #{tpu_custom_call.1} parent=5 // pred_region
        // Predicated region
        $region25: #{tpu_custom_call.1} parent=23 // pred_check
          %p162 = pneg %p37
        $region26: #{tpu_custom_call.1} parent=23 // pred_check_branch
          %164 = sbr.rel (%p162) target = $region28
        $region27: #{tpu_custom_call.1} parent=23 // pred_region
          %s165 = sand.u32 %s27, 1
          %s166 = scalar_lea.sflag [#allocation4], %s165
          %s167 = sand.u32 %s27, 1
          %s168 = smul.addr %s167, 8
          %s169 = scalar_lea.vmem [#allocation3], %s168
          %s171 = ssub.s32 128, 128
          %172 = vsyncadd %s166, %s171
          %s173 = smul.addr %s17, 128
          %s174 = scalar_lea.hbm %s0, %s173
          %s176 = sshll.u32 %s169, 4
          %s177 = int_to_ptr.vmem [resolvable:$true] %s176
          %179 = dma.hbm_to_vmem [thread:$0]  %s174, 128, %s177, %s166
        $region28: #{tpu_custom_call.1} parent=23 // pred_fallthru
          _
        // Predicated region
        $region29: #{tpu_custom_call.1} parent=23 // pred_check
          %p180 = pneg %p63
        $region30: #{tpu_custom_call.1} parent=23 // pred_check_branch
          %182 = sbr.rel (%p180) target = $region32
        $region31: #{tpu_custom_call.1} parent=23 // pred_region
          %p183 = scmp.lt.s32.totalorder %s17, 1
          %s184 = scalar_select %p183, %s17, 1
          %s185 = scalar_lea.vmem %s1, %s184
        $region32: #{tpu_custom_call.1} parent=23 // pred_fallthru
          _
      $region24: #{tpu_custom_call.1} parent=5 // pred_fallthru
        _
      %p186 = scmp.le.s32.totalorder 1, %s17
      %p187 = scmp.lt.s32.totalorder %s17, 3
      %p188 = pnand %p186, %p187
      %p189 = pneg %p188
      // Predicated region
      $region33: #{tpu_custom_call.1} parent=5 // pred_check
        _
      $region34: #{tpu_custom_call.1} parent=5 // pred_check_branch
        %191 = sbr.rel (%p188) target = $region36
      $region35: #{tpu_custom_call.1} parent=5 // pred_region
        %s192 = ssub.s32 %s17, 1
        %s193 = sand.u32 %s30, 1
        %s194 = scalar_lea.sflag [#allocation4], %s193
        %s195 = sand.u32 %s30, 1
        %s196 = smul.addr %s195, 8
        %s197 = scalar_lea.vmem [#allocation3], %s196
        // Predicated region
        $region37: #{tpu_custom_call.1} parent=35 // pred_check
          %p198 = pneg %p43
        $region38: #{tpu_custom_call.1} parent=35 // pred_check_branch
          %200 = sbr.rel (%p198) target = $region40
        $region39: #{tpu_custom_call.1} parent=35 // pred_region
          %201 = dma.done %s194, 128
        $region40: #{tpu_custom_call.1} parent=35 // pred_fallthru
          _
        %s202 = sand.u32 %s30, 1
        %s203 = scalar_lea.sflag [#allocation4], %s202
        %s204 = sand.u32 %s30, 1
        %s205 = smul.addr %s204, 8
        %s206 = scalar_lea.vmem [#allocation3], %s205
        %p207 = pneg %p43
        %p208 = pneg %p40
        %p209 = scmp.lt.s32.totalorder %s22, 1
        %s210 = scalar_select %p209, %s22, 1
        %s211 = scalar_lea.vmem %s1, %s210
        %p212 = pneg %p69
        %p213 = pneg %p66
        %p214 = pneg %p90
        %p215 = pneg %p87
        %p216 = pneg %p111
        %p217 = pneg %p108
        %p218 = pneg %p137
        %p219 = pneg %p134
        %s220 = sand.u32 %s124, 1
        %s221 = scalar_lea.sflag [#allocation5], %s220
        %s222 = sand.u32 %s124, 1
        %s223 = scalar_lea.vmem [#allocation6], %s222
        %p224 = scmp.lt.s32.totalorder %s22, 1
        %s225 = scalar_select %p224, %s22, 1
        %s226 = scalar_lea.vmem %s1, %s225
        %v227 = vld [vmem:[%s197] sm:$0xff]
        %v228 = vld [vmem:[%s2] sm:$0x1]
        %s229 = sld [smem:[#allocation2]]
        %v230 = vstv %s229
        %vm231 = vcmask 261120
        %v233 = vsel %vm231, %v228, 0
        %v236 = vsel %vm231, %v227, 0
        %238 = vmatprep.subr.mxu0 0.0
        %239 = vmatpush1.xpose.msra.mxu0 %v236
        %240 = vmatprep.subr.mxu0 0.0
        %241 = vmatpush1.xpose.msra.mxu0 0.0
        %242 = vmatprep.subr.mxu0 0.0
        %243 = vmatpush1.xpose.msra.mxu0 0.0
        %244 = vmatprep.subr.mxu0 0.0
        %245 = vmatpush1.xpose.msra.mxu0 0.0
        %246 = vmatprep.subr.mxu0 0.0
        %247 = vmatpush1.xpose.msra.mxu0 0.0
        %248 = vmatprep.subr.mxu0 0.0
        %249 = vmatpush1.xpose.msra.mxu0 0.0
        %250 = vmatprep.subr.mxu0 0.0
        %251 = vmatpush1.xpose.msra.mxu0 0.0
        %252 = vmatprep.subr.mxu0 0.0
        %253 = vmatpush1.xpose.msra.mxu0 0.0
        %254 = vmatprep.subr.mxu0 0.0
        %255 = vmatpush1.xpose.msra.mxu0 0.0
        %256 = vmatprep.subr.mxu0 0.0
        %257 = vmatpush1.xpose.msra.mxu0 0.0
        %258 = vmatprep.subr.mxu0 0.0
        %259 = vmatpush1.xpose.msra.mxu0 0.0
        %260 = vmatprep.subr.mxu0 0.0
        %261 = vmatpush1.xpose.msra.mxu0 0.0
        %262 = vmatprep.subr.mxu0 0.0
        %263 = vmatpush1.xpose.msra.mxu0 0.0
        %264 = vmatprep.subr.mxu0 0.0
        %265 = vmatpush1.xpose.msra.mxu0 0.0
        %266 = vmatprep.subr.mxu0 0.0
        %267 = vmatpush1.xpose.msra.mxu0 0.0
        %268 = vmatprep.subr.mxu0 0.0
        %269 = vmatpush1.xpose.msra.mxu0 0.0
        %270 = vmatprep.subr.mxu0 0.0
        %271 = vmatpush1.xpose.msra.mxu0 0.0
        %272 = vmatprep.subr.mxu0 0.0
        %273 = vmatpush1.xpose.msra.mxu0 0.0
        %274 = vmatprep.subr.mxu0 0.0
        %275 = vmatpush1.xpose.msra.mxu0 0.0
        %276 = vmatprep.subr.mxu0 0.0
        %277 = vmatpush1.xpose.msra.mxu0 0.0
        %278 = vmatprep.subr.mxu0 0.0
        %279 = vmatpush1.xpose.msra.mxu0 0.0
        %280 = vmatprep.subr.mxu0 0.0
        %281 = vmatpush1.xpose.msra.mxu0 0.0
        %282 = vmatprep.subr.mxu0 0.0
        %283 = vmatpush1.xpose.msra.mxu0 0.0
        %284 = vmatprep.subr.mxu0 0.0
        %285 = vmatpush1.xpose.msra.mxu0 0.0
        %286 = vmatprep.subr.mxu0 0.0
        %287 = vmatpush1.xpose.msra.mxu0 0.0
        %288 = vmatprep.subr.mxu0 0.0
        %289 = vmatpush1.xpose.msra.mxu0 0.0
        %290 = vmatprep.subr.mxu0 0.0
        %291 = vmatpush1.xpose.msra.mxu0 0.0
        %292 = vmatprep.subr.mxu0 0.0
        %293 = vmatpush1.xpose.msra.mxu0 0.0
        %294 = vmatprep.subr.mxu0 0.0
        %295 = vmatpush1.xpose.msra.mxu0 0.0
        %296 = vmatprep.subr.mxu0 0.0
        %297 = vmatpush1.xpose.msra.mxu0 0.0
        %298 = vmatprep.subr.mxu0 0.0
        %299 = vmatpush1.xpose.msra.mxu0 0.0
        %300 = vmatprep.subr.mxu0 0.0
        %301 = vmatpush1.xpose.msra.mxu0 0.0
        %302 = vmatprep.mubr.f32.mxu0 0.0
        %303 = vmatmul.mubr.f32.gmra.mrb[0].mxu0 %v233
        %v304 = vpop.f32.mrb[0].mxu0
        %v305 = vadd.f32 %v230, %v304
        %v306 = vpop.f32.mrb[0].mxu0
        %307 = vdwg.mxu0
        %v308 = vld [vmem:[%s226] sm:$0x1]
        %vm309 = vcmp.eq.s32.totalorder %v308, 0
        %v310 = vsel %vm309, -1e+09, %v305
        %vm311 = vcmask 57344
        %v312 = vsel %vm311, %v310, -inf
        %313 = vmax.xlane.f32.xlu0 %v312
        %v314 = vpop.xlane.xlu0 %313
        %v315 = vsub.f32 %v310, %v314
        %v316 = vmul.f32 %v315, 1.442695
        %v317 = vpow.pop %v316
        %v318 = vsel %vm311, %v317, 0.0
        %319 = vadd.xlane.f32.xlu0 %v318
        %v320 = vpop.xlane.xlu0 %319
        %v321 = vrcp.pop %v320
        %v322 = vmul.f32 %v317, %v321
        %vm323 = vcmask 64512
        %v325 = vsel %vm323, %v322, 0
        %327 = vmatprep.subr.mxu0 0.0
        %328 = vmatpush1.msra.mxu0 %v227
        %329 = vmatprep.subr.mxu0 0.0
        %330 = vmatpush1.msra.mxu0 0.0
        %331 = vmatprep.subr.mxu0 0.0
        %332 = vmatpush1.msra.mxu0 0.0
        %333 = vmatprep.subr.mxu0 0.0
        %334 = vmatpush1.msra.mxu0 0.0
        %335 = vmatprep.subr.mxu0 0.0
        %336 = vmatpush1.msra.mxu0 0.0
        %337 = vmatprep.subr.mxu0 0.0
        %338 = vmatpush1.msra.mxu0 0.0
        %339 = vmatprep.subr.mxu0 0.0
        %340 = vmatpush1.msra.mxu0 0.0
        %341 = vmatprep.subr.mxu0 0.0
        %342 = vmatpush1.msra.mxu0 0.0
        %343 = vmatprep.subr.mxu0 0.0
        %344 = vmatpush1.msra.mxu0 0.0
        %345 = vmatprep.subr.mxu0 0.0
        %346 = vmatpush1.msra.mxu0 0.0
        %347 = vmatprep.subr.mxu0 0.0
        %348 = vmatpush1.msra.mxu0 0.0
        %349 = vmatprep.subr.mxu0 0.0
        %350 = vmatpush1.msra.mxu0 0.0
        %351 = vmatprep.subr.mxu0 0.0
        %352 = vmatpush1.msra.mxu0 0.0
        %353 = vmatprep.subr.mxu0 0.0
        %354 = vmatpush1.msra.mxu0 0.0
        %355 = vmatprep.subr.mxu0 0.0
        %356 = vmatpush1.msra.mxu0 0.0
        %357 = vmatprep.subr.mxu0 0.0
        %358 = vmatpush1.msra.mxu0 0.0
        %359 = vmatprep.subr.mxu0 0.0
        %360 = vmatpush1.msra.mxu0 0.0
        %361 = vmatprep.subr.mxu0 0.0
        %362 = vmatpush1.msra.mxu0 0.0
        %363 = vmatprep.subr.mxu0 0.0
        %364 = vmatpush1.msra.mxu0 0.0
        %365 = vmatprep.subr.mxu0 0.0
        %366 = vmatpush1.msra.mxu0 0.0
        %367 = vmatprep.subr.mxu0 0.0
        %368 = vmatpush1.msra.mxu0 0.0
        %369 = vmatprep.subr.mxu0 0.0
        %370 = vmatpush1.msra.mxu0 0.0
        %371 = vmatprep.subr.mxu0 0.0
        %372 = vmatpush1.msra.mxu0 0.0
        %373 = vmatprep.subr.mxu0 0.0
        %374 = vmatpush1.msra.mxu0 0.0
        %375 = vmatprep.subr.mxu0 0.0
        %376 = vmatpush1.msra.mxu0 0.0
        %377 = vmatprep.subr.mxu0 0.0
        %378 = vmatpush1.msra.mxu0 0.0
        %379 = vmatprep.subr.mxu0 0.0
        %380 = vmatpush1.msra.mxu0 0.0
        %381 = vmatprep.subr.mxu0 0.0
        %382 = vmatpush1.msra.mxu0 0.0
        %383 = vmatprep.subr.mxu0 0.0
        %384 = vmatpush1.msra.mxu0 0.0
        %385 = vmatprep.subr.mxu0 0.0
        %386 = vmatpush1.msra.mxu0 0.0
        %387 = vmatprep.subr.mxu0 0.0
        %388 = vmatpush1.msra.mxu0 0.0
        %389 = vmatprep.subr.mxu0 0.0
        %390 = vmatpush1.msra.mxu0 0.0
        %391 = vmatprep.mubr.f32.mxu0 0.0
        %392 = vmatmul.mubr.f32.gmra.mrb[0].mxu0 %v325
        %v393 = vpop.f32.mrb[0].mxu0
        %v394 = vadd.f32 0.0, %v393
        %v395 = vpop.f32.mrb[0].mxu0
        %396 = vdwg.mxu0
        %vm397 = vcmask 253952
        %398 = vst.msk [vmem:[%s223] sm:$0x1] %vm397, %v394
        %s399 = sand.u32 %s124, 1
        %s400 = scalar_lea.sflag [#allocation5], %s399
        %s401 = sand.u32 %s124, 1
        %s402 = scalar_lea.vmem [#allocation6], %s401
        // Predicated region
        $region41: #{tpu_custom_call.1} parent=35 // pred_check
          %p403 = pneg %p134
        $region42: #{tpu_custom_call.1} parent=35 // pred_check_branch
          %405 = sbr.rel (%p403) target = $region44
        $region43: #{tpu_custom_call.1} parent=35 // pred_region
          %s407 = ssub.s32 16, 16
          %408 = vsyncadd %s400, %s407
          %s409 = smul.addr %s22, 16
          %s410 = scalar_lea.hbm %s4, %s409
          %s412 = sshll.u32 %s402, 4
          %s413 = int_to_ptr.vmem [resolvable:$true] %s412
          %415 = dma.vmem_to_hbm [thread:$0]  %s413, 16, %s410, %s400
        $region44: #{tpu_custom_call.1} parent=35 // pred_fallthru
          _
      $region36: #{tpu_custom_call.1} parent=5 // pred_fallthru
        _
      %p416 = scmp.le.s32.totalorder 2, %s17
      // Predicated region
      $region45: #{tpu_custom_call.1} parent=5 // pred_check
        %p417 = pneg %p416
      $region46: #{tpu_custom_call.1} parent=5 // pred_check_branch
        %419 = sbr.rel (%p417) target = $region48
      $region47: #{tpu_custom_call.1} parent=5 // pred_region
        %s420 = ssub.s32 %s17, 2
        // Predicated region
        $region49: #{tpu_custom_call.1} parent=47 // pred_check
          %p421 = pneg %p140
        $region50: #{tpu_custom_call.1} parent=47 // pred_check_branch
          %423 = sbr.rel (%p421) target = $region52
        $region51: #{tpu_custom_call.1} parent=47 // pred_region
          %s424 = sand.u32 %s125, 1
          %s425 = scalar_lea.sflag [#allocation5], %s424
          %s426 = sand.u32 %s125, 1
          %s427 = scalar_lea.vmem [#allocation6], %s426
          %428 = dma.done %s425, 16
        $region52: #{tpu_custom_call.1} parent=47 // pred_fallthru
          _
      $region48: #{tpu_custom_call.1} parent=5 // pred_fallthru
        _
    $region6: #{tpu_custom_call.1} parent=1 // loop_footer
      %s21 = sadd.s32 1, %s17
    $region7: #{tpu_custom_call.1} parent=1 // loop_footer_branch
      %16 = sbr.rel target = $region3
    $region8: #{tpu_custom_call.1} parent=1 // loop_exit
      _
    %429 = vsyncpa [#allocation4], 1
    %s430 = scalar_lea.sflag [#allocation4], 1
    %431 = vsyncpa %s430, 1
    %432 = vsyncpa [#allocation5], 1
    %s433 = scalar_lea.sflag [#allocation5], 1
    %434 = vsyncpa %s433, 1

</llo_original>
